<compile_context>
chip_gen: v7x
topology: tpu7x:2x2x1
jax: 0.10.0
libtpu: 0.0.40
codegen_flags: <defaults>
</compile_context>

<pallas_src>
import functools

import jax
import jax.numpy as jnp
from jax.experimental import pallas as pl
from jax.experimental.pallas import tpu as pltpu


def _round_up(x: int, m: int) -> int:
    return (x + m - 1) // m * m


def _vmem_budget():
    """(vmem_limit_bytes, per-logits-buffer budget), gated on physical VMEM."""
    try:
        phys = pltpu.get_tpu_info().vmem_capacity_bytes
    except Exception:
        phys = 64 * 1024 * 1024            # assume the smallest (v7x-sized) VMEM
    if phys >= 128 * 1024 * 1024:          # v5e / v6e: 128 MiB physical
        return 96 * 1024 * 1024, 8 * 1024 * 1024
    return 48 * 1024 * 1024, 8 * 1024 * 1024   # v7x: 64 MiB physical


def _fast_bf16_math(dtype) -> bool:
    """bf16 elementwise path only where the VPU/EUP run bf16 at full rate."""
    if dtype != jnp.bfloat16:
        return False
    try:
        kind = jax.devices()[0].device_kind.lower()
    except Exception:
        return False
    return any(tag in kind for tag in ("v6", "v7", "7x"))


def _pick_tile_n(n: int, itemsize: int) -> int:
    row_align = 8 if itemsize >= 4 else 16
    if n <= row_align:
        return n
    # >= 2 row tiles so the "parallel" N axis keeps both v7x TCs busy.
    g = max(2, pl.cdiv(n, 256))
    return min(n, 256, _round_up(pl.cdiv(n, g), row_align))


def _pick_tile_c(c: int, tile_n: int, itemsize: int, buf_budget: int) -> int:
    # Biggest lane-aligned class tile under the per-buffer budget; full C when
    # it fits (one fully contiguous DMA per row tile).
    cap = max(128, (buf_budget // (tile_n * itemsize)) // 128 * 128)
    if c <= cap:
        return c
    n_ct = pl.cdiv(c, cap)
    cand = min(cap, _round_up(pl.cdiv(c, n_ct), 128))   # balanced ragged tiles
    # Prefer a tile that divides C (compiles out the ragged-C mask) as long as
    # it does not shrink the tile below half the candidate size.
    for tc in range(cand, 127, -128):
        if c % tc == 0:
            if 2 * tc >= cand:
                return tc
            break
    return cand


def _focal_nll_kernel(logits_ref, target_ref, nll_ref, m_sc, l_sc, t_sc, *,
                      tile_c: int, num_classes: int, bf16_math: bool):
    """Per-row NLL with online logsumexp across C tiles.

    logits_ref: (TILE_N, TILE_C) native dtype, target_ref: (TILE_N, 1) int32,
    nll_ref: (TILE_N, 1) f32 output, scratches: (TILE_N, 1) f32 each.
    """
    j = pl.program_id(1)  # class-tile index (innermost, reduction axis)

    @pl.when(j == 0)
    def _init():
        m_sc[...] = jnp.full_like(m_sc, -jnp.inf)
        l_sc[...] = jnp.zeros_like(l_sc)
        t_sc[...] = jnp.zeros_like(t_sc)

    compute_dtype = jnp.bfloat16 if bf16_math else jnp.float32
    x = logits_ref[...].astype(compute_dtype)   # no-op when already native

    # Loop-invariant local column iota; shift the scalars (target id, class
    # bound) by the tile start instead of adding j*tile_c to every element.
    col = jax.lax.broadcasted_iota(jnp.int32, x.shape, dimension=1)
    tile_start = j * tile_c

    if num_classes % tile_c != 0:
        # Ragged last C tile: padded lanes must not contribute to max/sum.
        x = jnp.where(col < num_classes - tile_start, x, -jnp.inf)

    t_local = target_ref[...] - tile_start       # (TILE_N, 1) int32

    # Online (streaming) logsumexp update; accumulators stay f32.  The max of
    # bf16 values is bf16-exact, so casting m back for the subtraction is exact.
    m_prev = m_sc[...]
    m_cur = jnp.max(x, axis=-1, keepdims=True).astype(jnp.float32)
    m_new = jnp.maximum(m_prev, m_cur)

    p = jnp.exp(x - m_new.astype(compute_dtype))          # EUP (bf16 on v6e/v7x)
    g = jnp.where(col == t_local, x, 0.0)                 # target-logit gather

    if bf16_math:
        # Lane reductions on the otherwise-idle MXU, accumulating in f32;
        # frees the VALU slot on the compute-bound generations.
        ones = jnp.ones((x.shape[-1], 1), dtype=compute_dtype)
        p_sum = jnp.dot(p, ones, preferred_element_type=jnp.float32)
        g_sum = jnp.dot(g, ones, preferred_element_type=jnp.float32)
    else:
        p_sum = jnp.sum(p, axis=-1, keepdims=True)
        g_sum = jnp.sum(g, axis=-1, keepdims=True)

    l_sc[...] = l_sc[...] * jnp.exp(m_prev - m_new) + p_sum
    t_sc[...] = t_sc[...] + g_sum
    m_sc[...] = m_new

    @pl.when(j == pl.num_programs(1) - 1)
    def _finalize():
        lse = m_sc[...] + jnp.log(l_sc[...])     # (TILE_N, 1)
        nll_ref[...] = lse - t_sc[...]


def focal_loss(logits: jax.Array, target: jax.Array, gamma: float = 0.0,
               *, tile_n: int | None = None, tile_c: int | None = None,
               eps: float = 1e-7) -> jax.Array:
    """logits: (N, C) float (f32/bf16), target: (N,) int class ids. Scalar f32."""
    del eps  # unused in the original module's forward() as well
    n, c = logits.shape
    itemsize = logits.dtype.itemsize
    target2d = target.astype(jnp.int32).reshape(n, 1)

    vmem_limit, buf_budget = _vmem_budget()
    if tile_n is None:
        tile_n = _pick_tile_n(n, itemsize)
    tile_n = min(tile_n, n)
    if tile_c is None:
        tile_c = _pick_tile_c(c, tile_n, itemsize, buf_budget)
    tile_c = min(tile_c, c)

    grid = (pl.cdiv(n, tile_n), pl.cdiv(c, tile_c))
    bf16_math = _fast_bf16_math(logits.dtype)

    kernel = functools.partial(_focal_nll_kernel, tile_c=tile_c,
                               num_classes=c, bf16_math=bf16_math)

    nll = pl.pallas_call(
        kernel,
        out_shape=jax.ShapeDtypeStruct((n, 1), jnp.float32),
        grid_spec=pltpu.PrefetchScalarGridSpec(
            num_scalar_prefetch=0,
            grid=grid,
            in_specs=[
                # Logits stream: varies with both grid axes (pipelined DMA).
                pl.BlockSpec((tile_n, tile_c), lambda i, j: (i, j)),
                # Targets: constant in the C axis -> stays resident in VMEM.
                pl.BlockSpec((tile_n, 1), lambda i, j: (i, 0)),
            ],
            # Per-row NLL; constant in the C axis -> written once at j == last.
            out_specs=pl.BlockSpec((tile_n, 1), lambda i, j: (i, 0)),
            scratch_shapes=[
                pltpu.VMEM((tile_n, 1), jnp.float32),  # running max m
                pltpu.VMEM((tile_n, 1), jnp.float32),  # running sum l
                pltpu.VMEM((tile_n, 1), jnp.float32),  # target-logit accum
            ],
        ),
        compiler_params=pltpu.CompilerParams(
            # N tiles are independent -> parallel (megacore on v7x);
            # C is the reduction axis -> arbitrary, kept innermost.
            dimension_semantics=("parallel", "arbitrary"),
            vmem_limit_bytes=vmem_limit,
        ),
        cost_estimate=pl.CostEstimate(
            flops=6 * n * c,
            transcendentals=n * c + n,
            bytes_accessed=n * c * itemsize + 8 * n,
        ),
    )(logits, target2d)

    # Mean-reduced cross entropy (torch.nn.CrossEntropyLoss default), then the
    # focal modulation applied to that scalar -- tiny, so it lives in JAX.
    logp = jnp.sum(nll) / n
    gamma = float(gamma)
    if gamma == 0.0:
        return logp                                  # (1 - p)**0 == 1
    p = jnp.exp(-logp)
    one_minus_p = jnp.maximum(1.0 - p, 0.0)          # guard fp rounding at logp ~ 0
    if gamma == int(gamma) and 0 < gamma <= 4:
        mod = one_minus_p                            # repeated mul, no exp/log
        for _ in range(int(gamma) - 1):
            mod = mod * one_minus_p
    else:
        mod = one_minus_p ** gamma
    return mod * logp


def _reference_focal_loss(logits, target, gamma):
    # Pure-JAX reference mirroring the PyTorch module.
    logsm = jax.nn.log_softmax(logits.astype(jnp.float32), axis=-1)
    nll = -jnp.take_along_axis(logsm, target.astype(jnp.int32)[:, None], axis=-1)[:, 0]
    logp = jnp.mean(nll)
    p = jnp.exp(-logp)
    return (1.0 - p) ** gamma * logp


if __name__ == "__main__":
    key = jax.random.PRNGKey(0)

    def run_case(n, c, gamma, dtype, tile_n=None, tile_c=None,
                 rtol=1e-5, atol=1e-5):
        kl, kt = jax.random.split(jax.random.fold_in(key, n * 1000 + c))
        logits = jax.random.normal(kl, (n, c), dtype=jnp.float32).astype(dtype)
        target = jax.random.randint(kt, (n,), 0, c, dtype=jnp.int32)
        out = focal_loss(logits, target, gamma=gamma,
                         tile_n=tile_n, tile_c=tile_c)
        out = jax.block_until_ready(out)
        ref = _reference_focal_loss(logits, target, gamma)
        assert jnp.allclose(out, ref, rtol=rtol, atol=atol), (
            n, c, gamma, str(dtype), out, ref)

    # Small base case (batch=8 samples, 32 classes), focal gamma=2.
    run_case(8, 32, gamma=2.0, dtype=jnp.float32)
    # Module default gamma=0: loss == plain mean cross entropy.
    run_case(8, 32, gamma=0.0, dtype=jnp.float32)
    # Multi-tile grid with ragged N and C edges (online logsumexp + masks).
    run_case(20, 200, gamma=2.0, dtype=jnp.float32, tile_n=8, tile_c=128)
    # Default tiling: >=2 row tiles (megacore), full-C contiguous DMA, ragged N.
    run_case(300, 1000, gamma=2.0, dtype=jnp.float32)
    # Native bf16 DMA, multiple C tiles (bf16 math + MXU reduce on v6e/v7x).
    run_case(16, 384, gamma=2.0, dtype=jnp.bfloat16, tile_n=16, tile_c=128,
             rtol=2e-2, atol=2e-2)
    # bf16 with default tiling (full-C path, 2 row tiles).
    run_case(64, 512, gamma=2.0, dtype=jnp.bfloat16, rtol=2e-2, atol=2e-2)

    print("KERNEL_OK")
</pallas_src>

<mosaic_0001>
module attributes {stable_mosaic.version = 11 : i64} {
  func.func @_focal_nll_kernel(%arg0: i32, %arg1: i32, %arg2: memref<8x32xf32, #tpu.memory_space<vmem>>, %arg3: memref<8x1xi32, #tpu.memory_space<vmem>>, %arg4: memref<8x1xf32, #tpu.memory_space<vmem>>, %arg5: memref<8x1xf32, #tpu.memory_space<vmem>>, %arg6: memref<8x1xf32, #tpu.memory_space<vmem>>, %arg7: memref<8x1xf32, #tpu.memory_space<vmem>>) attributes {dimension_semantics = [#tpu.dimension_semantics<parallel>, #tpu.dimension_semantics<arbitrary>], iteration_bounds = array<i64: 1, 1>, scalar_prefetch = 0 : i64, scratch_operands = 3 : i64, tpu.core_type = #tpu.core_type<tc>, window_params = [{transform_indices = @transform_0, window_bounds = array<i64: 8, 32>}, {transform_indices = @transform_1, window_bounds = array<i64: 8, 1>}, {transform_indices = @transform_2, window_bounds = array<i64: 8, 1>}]} {
    %c0_i32 = arith.constant 0 : i32
    %0 = arith.cmpi eq, %arg1, %c0_i32 : i32
    %1 = arith.extui %0 : i1 to i32
    %c0_i32_0 = arith.constant 0 : i32
    %2 = arith.cmpi ne, %1, %c0_i32_0 : i32
    scf.if %2 {
      %cst_21 = arith.constant 0xFF800000 : f32
      %37 = vector.broadcast %cst_21 : f32 to vector<8x1xf32>
      %c0_22 = arith.constant 0 : index
      %c0_23 = arith.constant 0 : index
      %38 = vector.load %arg5[%c0_22, %c0_23] : memref<8x1xf32, #tpu.memory_space<vmem>>, vector<8x1xf32>
      tpu.vector_store %arg5[%c0_22, %c0_23], %37 {strides = array<i32>} : memref<8x1xf32, #tpu.memory_space<vmem>>, vector<8x1xf32>,
      %cst_24 = arith.constant 0.000000e+00 : f32
      %39 = vector.broadcast %cst_24 : f32 to vector<8x1xf32>
      %c0_25 = arith.constant 0 : index
      %c0_26 = arith.constant 0 : index
      %40 = vector.load %arg6[%c0_25, %c0_26] : memref<8x1xf32, #tpu.memory_space<vmem>>, vector<8x1xf32>
      tpu.vector_store %arg6[%c0_25, %c0_26], %39 {strides = array<i32>} : memref<8x1xf32, #tpu.memory_space<vmem>>, vector<8x1xf32>,
      %cst_27 = arith.constant 0.000000e+00 : f32
      %41 = vector.broadcast %cst_27 : f32 to vector<8x1xf32>
      %c0_28 = arith.constant 0 : index
      %c0_29 = arith.constant 0 : index
      %42 = vector.load %arg7[%c0_28, %c0_29] : memref<8x1xf32, #tpu.memory_space<vmem>>, vector<8x1xf32>
      tpu.vector_store %arg7[%c0_28, %c0_29], %41 {strides = array<i32>} : memref<8x1xf32, #tpu.memory_space<vmem>>, vector<8x1xf32>,
    } else {
    }
    %c0 = arith.constant 0 : index
    %c0_1 = arith.constant 0 : index
    %3 = vector.load %arg2[%c0, %c0_1] : memref<8x32xf32, #tpu.memory_space<vmem>>, vector<8x32xf32>
    %4 = tpu.iota {dimensions = array<i32: 1>} : vector<8x32xi32>
    %c32_i32 = arith.constant 32 : i32
    %5 = arith.muli %arg1, %c32_i32 : i32
    %c0_2 = arith.constant 0 : index
    %c0_3 = arith.constant 0 : index
    %6 = vector.load %arg3[%c0_2, %c0_3] : memref<8x1xi32, #tpu.memory_space<vmem>>, vector<8x1xi32>
    %7 = vector.broadcast %5 : i32 to vector<8x1xi32>
    %8 = arith.subi %6, %7 : vector<8x1xi32>
    %c0_4 = arith.constant 0 : index
    %c0_5 = arith.constant 0 : index
    %9 = vector.load %arg5[%c0_4, %c0_5] : memref<8x1xf32, #tpu.memory_space<vmem>>, vector<8x1xf32>
    %cst = arith.constant dense<0xFF800000> : vector<8xf32>
    %10 = vector.multi_reduction <maximumf>, %3, %cst [1] : vector<8x32xf32> to vector<8xf32>
    %11 = vector.shape_cast %10 : vector<8xf32> to vector<8x1xf32>
    %12 = arith.maximumf %9, %11 : vector<8x1xf32>
    %13 = vector.broadcast %12 : vector<8x1xf32> to vector<8x32xf32>
    %14 = arith.subf %3, %13 : vector<8x32xf32>
    %15 = math.exp %14 : vector<8x32xf32>
    %16 = vector.broadcast %8 : vector<8x1xi32> to vector<8x32xi32>
    %17 = arith.cmpi eq, %4, %16 : vector<8x32xi32>
    %cst_6 = arith.constant 0.000000e+00 : f32
    %18 = vector.broadcast %cst_6 : f32 to vector<8x32xf32>
    %19 = arith.select %17, %3, %18 : vector<8x32xi1>, vector<8x32xf32>
    %cst_7 = arith.constant dense<0.000000e+00> : vector<8xf32>
    %20 = vector.multi_reduction <add>, %15, %cst_7 [1] : vector<8x32xf32> to vector<8xf32>
    %21 = vector.shape_cast %20 : vector<8xf32> to vector<8x1xf32>
    %cst_8 = arith.constant dense<0.000000e+00> : vector<8xf32>
    %22 = vector.multi_reduction <add>, %19, %cst_8 [1] : vector<8x32xf32> to vector<8xf32>
    %23 = vector.shape_cast %22 : vector<8xf32> to vector<8x1xf32>
    %c0_9 = arith.constant 0 : index
    %c0_10 = arith.constant 0 : index
    %24 = vector.load %arg6[%c0_9, %c0_10] : memref<8x1xf32, #tpu.memory_space<vmem>>, vector<8x1xf32>
    %25 = arith.subf %9, %12 : vector<8x1xf32>
    %26 = math.exp %25 : vector<8x1xf32>
    %27 = arith.mulf %24, %26 : vector<8x1xf32>
    %28 = arith.addf %27, %21 : vector<8x1xf32>
    %c0_11 = arith.constant 0 : index
    %c0_12 = arith.constant 0 : index
    %29 = vector.load %arg6[%c0_11, %c0_12] : memref<8x1xf32, #tpu.memory_space<vmem>>, vector<8x1xf32>
    tpu.vector_store %arg6[%c0_11, %c0_12], %28 {strides = array<i32>} : memref<8x1xf32, #tpu.memory_space<vmem>>, vector<8x1xf32>,
    %c0_13 = arith.constant 0 : index
    %c0_14 = arith.constant 0 : index
    %30 = vector.load %arg7[%c0_13, %c0_14] : memref<8x1xf32, #tpu.memory_space<vmem>>, vector<8x1xf32>
    %31 = arith.addf %30, %23 : vector<8x1xf32>
    %c0_15 = arith.constant 0 : index
    %c0_16 = arith.constant 0 : index
    %32 = vector.load %arg7[%c0_15, %c0_16] : memref<8x1xf32, #tpu.memory_space<vmem>>, vector<8x1xf32>
    tpu.vector_store %arg7[%c0_15, %c0_16], %31 {strides = array<i32>} : memref<8x1xf32, #tpu.memory_space<vmem>>, vector<8x1xf32>,
    %c0_17 = arith.constant 0 : index
    %c0_18 = arith.constant 0 : index
    %33 = vector.load %arg5[%c0_17, %c0_18] : memref<8x1xf32, #tpu.memory_space<vmem>>, vector<8x1xf32>
    tpu.vector_store %arg5[%c0_17, %c0_18], %12 {strides = array<i32>} : memref<8x1xf32, #tpu.memory_space<vmem>>, vector<8x1xf32>,
    %c0_i32_19 = arith.constant 0 : i32
    %34 = arith.cmpi eq, %arg1, %c0_i32_19 : i32
    %35 = arith.extui %34 : i1 to i32
    %c0_i32_20 = arith.constant 0 : i32
    %36 = arith.cmpi ne, %35, %c0_i32_20 : i32
    scf.if %36 {
      %c0_21 = arith.constant 0 : index
      %c0_22 = arith.constant 0 : index
      %37 = vector.load %arg5[%c0_21, %c0_22] : memref<8x1xf32, #tpu.memory_space<vmem>>, vector<8x1xf32>
      %c0_23 = arith.constant 0 : index
      %c0_24 = arith.constant 0 : index
      %38 = vector.load %arg6[%c0_23, %c0_24] : memref<8x1xf32, #tpu.memory_space<vmem>>, vector<8x1xf32>
      %39 = math.log %38 : vector<8x1xf32>
      %40 = arith.addf %37, %39 : vector<8x1xf32>
      %c0_25 = arith.constant 0 : index
      %c0_26 = arith.constant 0 : index
      %41 = vector.load %arg7[%c0_25, %c0_26] : memref<8x1xf32, #tpu.memory_space<vmem>>, vector<8x1xf32>
      %42 = arith.subf %40, %41 : vector<8x1xf32>
      %c0_27 = arith.constant 0 : index
      %c0_28 = arith.constant 0 : index
      %43 = vector.load %arg4[%c0_27, %c0_28] : memref<8x1xf32, #tpu.memory_space<vmem>>, vector<8x1xf32>
      tpu.vector_store %arg4[%c0_27, %c0_28], %42 {strides = array<i32>} : memref<8x1xf32, #tpu.memory_space<vmem>>, vector<8x1xf32>,
    } else {
    }
    return
  }
  func.func @transform_0(%arg0: i32, %arg1: i32) -> (i32, i32) {
    %c0_i32 = arith.constant 0 : i32
    return %arg0, %arg1 : i32, i32
  }
  func.func @transform_1(%arg0: i32, %arg1: i32) -> (i32, i32) {
    %c0_i32 = arith.constant 0 : i32
    %c0_i32_0 = arith.constant 0 : i32
    return %arg0, %c0_i32 : i32, i32
  }
  func.func @transform_2(%arg0: i32, %arg1: i32) -> (i32, i32) {
    %c0_i32 = arith.constant 0 : i32
    %c0_i32_0 = arith.constant 0 : i32
    return %arg0, %c0_i32 : i32, i32
  }
}

</mosaic_0001>

<llo_original>
// kernel: tpu_custom_call.1
$region0: #{tpu_custom_call.1}
  #allocation0 [shape = 'u32[]', space=smem, size = 0x4, offset = 0x4, fixed_abs, tag = 'smem constant byte address 0x4 - core index']
  #allocation1 [shape = 'u32[144,128]{1,0:T(1,128)}', space=vmem, size = 0x12000, scoped, tag = 'internal scratch']
  #allocation2 [shape = 'f32[8,1]{1,0:T(8,128)}', space=vmem, size = 0x1000, scoped, tag = 'scratch operand']
  #allocation3 [shape = 'f32[8,1]{1,0:T(8,128)}', space=vmem, size = 0x1000, scoped, tag = 'scratch operand']
  #allocation4 [shape = 'f32[8,1]{1,0:T(8,128)}', space=vmem, size = 0x1000, scoped, tag = 'scratch operand']
  %s0 = inlined_call_operand.vmem [shape: f32[8,32], index: 0, kind: input, shape index: {}]
  %s1 = inlined_call_operand.vmem [shape: s32[8,1], index: 1, kind: input, shape index: {}]
  %s2 = inlined_call_operand.vmem [shape: f32[8,1], index: 2, kind: output, shape index: {}]
  %s3 = sld [smem:[#allocation0]]
  $region26: #{tpu_custom_call.1} parent=0
    _
  %s5 = ssub.s32 1, %s3
  %s6 = scalar_select 0, %s5, %s3
  // Predicated region
  $region2: #{tpu_custom_call.1} parent=0 // pred_check
    _
  $region3: #{tpu_custom_call.1} parent=0 // pred_check_branch
    %8 = sbr.rel (0) target = $region5
  $region4: #{tpu_custom_call.1} parent=0 // pred_region
    _
  $region5: #{tpu_custom_call.1} parent=0 // pred_fallthru
    _
  // Predicated region
  $region6: #{tpu_custom_call.1} parent=0 // pred_check
    _
  $region7: #{tpu_custom_call.1} parent=0 // pred_check_branch
    %10 = sbr.rel (0) target = $region9
  $region8: #{tpu_custom_call.1} parent=0 // pred_region
    _
  $region9: #{tpu_custom_call.1} parent=0 // pred_fallthru
    _
  %p11 = scmp.eq.s32.totalorder 0, 0
  // Predicated region
  $region10: #{tpu_custom_call.1} parent=0 // pred_check
    %p12 = pneg %p11
  $region11: #{tpu_custom_call.1} parent=0 // pred_check_branch
    %14 = sbr.rel (%p12) target = $region13
  $region12: #{tpu_custom_call.1} parent=0 // pred_region
    %vm15 = vcmask 7168
    %16 = vst.msk [vmem:[#allocation2] sm:$0xff] %vm15, -inf
    %17 = vst.msk [vmem:[#allocation3] sm:$0xff] %vm15, 0.0
    %18 = vst.msk [vmem:[#allocation4] sm:$0xff] %vm15, 0.0
  $region13: #{tpu_custom_call.1} parent=0 // pred_fallthru
    _
  %v19 = vld [vmem:[%s0] sm:$0xff]
  %v20 = vlaneseq
  %v21 = vand.u32 %v20, 127
  %s22 = smul.u32 0, 32
  %v23 = vld [vmem:[%s1] sm:$0xff]
  %v24 = vstv %s22
  %v25 = vsub.s32 %v23, %v24
  %v26 = vld [vmem:[#allocation2] sm:$0xff]
  %vm27 = vcmask 261120
  %v28 = vsel %vm27, %v19, -inf
  %29 = vmax.xlane.f32.xlu0 %v28
  %v30 = vpop.xlane.xlu0 %29
  %v31 = vmax.f32 %v26, %v30
  %33 = vset.pattern.permute.xlu0 0
  %34 = vperm.xlu0 %33, %v31
  %v35 = vpop.permute.xlu0 %34
  %v37 = vsub.f32 %v19, %v35
  %v38 = vmul.f32 %v37, 1.442695
  %v39 = vpow.pop %v38
  %40 = vset.pattern.permute.xlu0 0
  %41 = vperm.xlu0 %40, %v25
  %v42 = vpop.permute.xlu0 %41
  %vm43 = vcmp.eq.s32.totalorder %v21, %v42
  %v44 = vsel %vm43, %v19, 0.0
  %v45 = vsel %vm27, %v39, 0.0
  %46 = vadd.xlane.f32.xlu0 %v45
  %v47 = vpop.xlane.xlu0 %46
  %v48 = vsel %vm27, %v44, 0.0
  %49 = vadd.xlane.f32.xlu0 %v48
  %v50 = vpop.xlane.xlu0 %49
  %v51 = vld [vmem:[#allocation3] sm:$0xff]
  %v52 = vsub.f32 %v26, %v31
  %v53 = vmul.f32 %v52, 1.442695
  %v54 = vpow.pop %v53
  %v55 = vmul.f32 %v51, %v54
  %v56 = vadd.f32 %v55, %v47
  %vm57 = vcmask 7168
  %58 = vst.msk [vmem:[#allocation3] sm:$0xff] %vm57, %v56
  %v59 = vld [vmem:[#allocation4] sm:$0xff]
  %v60 = vadd.f32 %v59, %v50
  %61 = vst.msk [vmem:[#allocation4] sm:$0xff] %vm57, %v60
  %62 = vst.msk [vmem:[#allocation2] sm:$0xff] %vm57, %v31
  // Predicated region
  $region14: #{tpu_custom_call.1} parent=0 // pred_check
    %p63 = pneg %p11
  $region15: #{tpu_custom_call.1} parent=0 // pred_check_branch
    %65 = sbr.rel (%p63) target = $region17
  $region16: #{tpu_custom_call.1} parent=0 // pred_region
    %v66 = vld [vmem:[#allocation2] sm:$0xff]
    %v67 = vld [vmem:[#allocation3] sm:$0xff]
    %v68 = vlog2.pop %v67
    %v69 = vmul.f32 %v68, 0.6931472
    %v70 = vadd.f32 %v66, %v69
    %v71 = vld [vmem:[#allocation4] sm:$0xff]
    %v72 = vsub.f32 %v70, %v71
    %73 = vst.msk [vmem:[%s2] sm:$0xff] %vm57, %v72
  $region17: #{tpu_custom_call.1} parent=0 // pred_fallthru
    _
  // Predicated region
  $region18: #{tpu_custom_call.1} parent=0 // pred_check
    _
  $region19: #{tpu_custom_call.1} parent=0 // pred_check_branch
    %75 = sbr.rel (0) target = $region21
  $region20: #{tpu_custom_call.1} parent=0 // pred_region
    _
  $region21: #{tpu_custom_call.1} parent=0 // pred_fallthru
    _
  // Predicated region
  $region22: #{tpu_custom_call.1} parent=0 // pred_check
    _
  $region23: #{tpu_custom_call.1} parent=0 // pred_check_branch
    %77 = sbr.rel (0) target = $region25
  $region24: #{tpu_custom_call.1} parent=0 // pred_region
    _
  $region25: #{tpu_custom_call.1} parent=0 // pred_fallthru
    _

</llo_original>
